<compile_context>
chip_gen: v5e
topology: v5e:2x2
jax: 0.10.0
libtpu: 0.0.40
codegen_flags: <defaults>
</compile_context>

<pallas_src>
import jax
import jax.numpy as jnp
from jax import lax
from jax.experimental import pallas as pl
from jax.experimental.pallas import tpu as pltpu


def _disc_kernel(x_ref, w_ref, b_ref, o_ref):
    # x_ref: (tb, Dp) VMEM   -- batch rows, (folded) features on the lane axis
    # w_ref: (o,  Dp) VMEM   -- o = 1 (plain) or 128//D (block-diagonal folded)
    # b_ref: (1, 1)   VMEM
    # o_ref: (o, tb)  VMEM   -- batch on the lane axis -> lane-dense stores
    z = lax.dot_general(
        w_ref[...], x_ref[...],
        dimension_numbers=(((1,), (1,)), ((), ())),   # contract the feature dim
        preferred_element_type=jnp.float32,
    )                                                 # (o, tb)
    z = z + b_ref[...]                                # (1,1) broadcast
    # sigmoid(z) = 0.5 * (1 + tanh(z/2)); single EUP transcendental, no overflow.
    o_ref[...] = (0.5 * (1.0 + jnp.tanh(0.5 * z))).astype(o_ref.dtype)


def _round_up(n, m):
    return ((n + m - 1) // m) * m


def _choose_batch_tile(bp, dp, target_bytes):
    """Rows per block (multiple of 128, or the full extent) and grid size."""
    if bp <= 256:
        return bp, 1                                  # one full-extent block
    row_bytes = _round_up(dp, 128) * 4                # physical VMEM bytes/row (f32)
    tb = max((target_bytes // row_bytes) // 128 * 128, 128)
    # At least two tiles so v7x's second TensorCore gets work.
    tb = min(tb, _round_up(pl.cdiv(bp, 2), 128))
    return tb, pl.cdiv(bp, tb)


def discriminator_forward(x, weight, bias, *, target_block_bytes=8 << 20):
    """x: (B, D) f32; weight: (1, D) f32 (PyTorch (out, in) layout); bias: (1,) f32."""
    B, D = x.shape
    assert weight.shape == (1, D), "Discriminator weight must be (1, input_length)"
    b2 = bias.reshape(1, 1).astype(jnp.float32)

    # Fold small feature dims so the 128-lane axis of x tiles is fully populated.
    if D < 128 and 128 % D == 0 and B % (128 // D) == 0:
        fold = 128 // D
        xp = x.reshape(B // fold, 128)                              # free reshape
        wp = jnp.kron(jnp.eye(fold, dtype=weight.dtype), weight)    # (fold, 128)
    else:
        fold = 1
        xp, wp = x, weight

    bp, dp = xp.shape
    o = fold

    tb, nb = _choose_batch_tile(bp, dp, target_block_bytes)

    # VMEM budget: double-buffered x tile (lane-padded) + small weight/bias/out.
    x_block_bytes = tb * _round_up(dp, 128) * 4
    vmem_limit = min(max(2 * x_block_bytes + (4 << 20), 16 << 20), 48 << 20)

    out = pl.pallas_call(
        _disc_kernel,
        out_shape=jax.ShapeDtypeStruct((o, bp), x.dtype),
        grid=(nb,),
        in_specs=[
            pl.BlockSpec((tb, dp), lambda i: (i, 0)),   # x: streamed over batch
            pl.BlockSpec((o, dp), lambda i: (0, 0)),    # weight: resident
            pl.BlockSpec((1, 1), lambda i: (0, 0)),     # bias: resident
        ],
        out_specs=pl.BlockSpec((o, tb), lambda i: (0, i)),
        compiler_params=pltpu.CompilerParams(
            dimension_semantics=("parallel",),          # independent batch tiles
            vmem_limit_bytes=int(vmem_limit),
        ),
    )(xp, wp, b2)

    # out[j, i] = sigmoid(w . x[fold*i + j] + b); transpose+reshape -> (B, 1).
    return out.T.reshape(B, 1)


def reference_forward(x, weight, bias):
    return jax.nn.sigmoid(x @ weight.T + bias)


def _make_case(key, batch, input_length):
    k_x, k_w, k_b = jax.random.split(key, 3)
    bound = 1.0 / jnp.sqrt(jnp.float32(input_length))
    weight = jax.random.uniform(k_w, (1, input_length), dtype=jnp.float32,
                                minval=-bound, maxval=bound)
    bias = jax.random.uniform(k_b, (1,), dtype=jnp.float32,
                              minval=-bound, maxval=bound)
    x = jax.random.normal(k_x, (batch, input_length), dtype=jnp.float32)
    return x, weight, bias


if __name__ == "__main__":
    key = jax.random.PRNGKey(0)
    keys = jax.random.split(key, 3)

    # (batch, input_length): folded single-tile, general (non-folding) path,
    # and folded multi-tile with a partial last block.
    cases = [(8, 32), (8, 48), (2056, 32)]

    for k, (batch, input_length) in zip(keys, cases):
        x, weight, bias = _make_case(k, batch, input_length)
        out = discriminator_forward(x, weight, bias)
        out = jax.block_until_ready(out)
        ref = reference_forward(x, weight, bias)
        assert out.shape == (batch, 1)
        assert jnp.allclose(out, ref, atol=1e-5, rtol=1e-5), \
            f"mismatch vs reference at shape ({batch}, {input_length})"

    print("KERNEL_OK")
</pallas_src>

<mosaic_0001>
module attributes {stable_mosaic.version = 11 : i64} {
  func.func @_disc_kernel(%arg0: i32, %arg1: memref<2x128xf32, #tpu.memory_space<vmem>>, %arg2: memref<4x128xf32, #tpu.memory_space<vmem>>, %arg3: memref<1x1xf32, #tpu.memory_space<vmem>>, %arg4: memref<4x2xf32, #tpu.memory_space<vmem>>) attributes {dimension_semantics = [#tpu.dimension_semantics<parallel>], iteration_bounds = array<i64: 1>, scalar_prefetch = 0 : i64, scratch_operands = 0 : i64, tpu.core_type = #tpu.core_type<tc>, window_params = [{transform_indices = @transform_0, window_bounds = array<i64: 2, 128>}, {pipeline_mode = #tpu.pipeline_mode<synchronous>, transform_indices = @transform_1, window_bounds = array<i64: 4, 128>}, {pipeline_mode = #tpu.pipeline_mode<synchronous>, transform_indices = @transform_2, window_bounds = array<i64: 1, 1>}, {transform_indices = @transform_3, window_bounds = array<i64: 4, 2>}]} {
    %c0 = arith.constant 0 : index
    %c0_0 = arith.constant 0 : index
    %0 = vector.load %arg2[%c0, %c0_0] : memref<4x128xf32, #tpu.memory_space<vmem>>, vector<4x128xf32>
    %c0_1 = arith.constant 0 : index
    %c0_2 = arith.constant 0 : index
    %1 = vector.load %arg1[%c0_1, %c0_2] : memref<2x128xf32, #tpu.memory_space<vmem>>, vector<2x128xf32>
    %cst = arith.constant dense<0.000000e+00> : vector<4x2xf32>
    %2 = tpu.matmul %0, %1, %cst {dimension_numbers = #tpu.dot_dimension_numbers<[1], [1], [0], [0], [0, 0, 1, 0], [], []>} : vector<4x128xf32>, vector<2x128xf32>, vector<4x2xf32> -> vector<4x2xf32>
    %c0_3 = arith.constant 0 : index
    %c0_4 = arith.constant 0 : index
    %3 = vector.load %arg3[%c0_3, %c0_4] : memref<1x1xf32, #tpu.memory_space<vmem>>, vector<1x1xf32>
    %4 = vector.broadcast %3 : vector<1x1xf32> to vector<4x2xf32>
    %5 = arith.addf %2, %4 : vector<4x2xf32>
    %cst_5 = arith.constant 5.000000e-01 : f32
    %6 = vector.broadcast %cst_5 : f32 to vector<4x2xf32>
    %7 = arith.mulf %6, %5 : vector<4x2xf32>
    %8 = math.tanh %7 : vector<4x2xf32>
    %cst_6 = arith.constant 1.000000e+00 : f32
    %9 = vector.broadcast %cst_6 : f32 to vector<4x2xf32>
    %10 = arith.addf %9, %8 : vector<4x2xf32>
    %cst_7 = arith.constant 5.000000e-01 : f32
    %11 = vector.broadcast %cst_7 : f32 to vector<4x2xf32>
    %12 = arith.mulf %11, %10 : vector<4x2xf32>
    %c0_8 = arith.constant 0 : index
    %c0_9 = arith.constant 0 : index
    %13 = vector.load %arg4[%c0_8, %c0_9] : memref<4x2xf32, #tpu.memory_space<vmem>>, vector<4x2xf32>
    tpu.vector_store %arg4[%c0_8, %c0_9], %12 {strides = array<i32>} : memref<4x2xf32, #tpu.memory_space<vmem>>, vector<4x2xf32>,
    return
  }
  func.func @transform_0(%arg0: i32) -> (i32, i32) {
    %c0_i32 = arith.constant 0 : i32
    %c0_i32_0 = arith.constant 0 : i32
    return %arg0, %c0_i32 : i32, i32
  }
  func.func @transform_1(%arg0: i32) -> (i32, i32) {
    %c0_i32 = arith.constant 0 : i32
    %c0_i32_0 = arith.constant 0 : i32
    %c0_i32_1 = arith.constant 0 : i32
    return %c0_i32, %c0_i32_0 : i32, i32
  }
  func.func @transform_2(%arg0: i32) -> (i32, i32) {
    %c0_i32 = arith.constant 0 : i32
    %c0_i32_0 = arith.constant 0 : i32
    %c0_i32_1 = arith.constant 0 : i32
    return %c0_i32, %c0_i32_0 : i32, i32
  }
  func.func @transform_3(%arg0: i32) -> (i32, i32) {
    %c0_i32 = arith.constant 0 : i32
    %c0_i32_0 = arith.constant 0 : i32
    return %c0_i32, %arg0 : i32, i32
  }
}

</mosaic_0001>

<llo_original>
// kernel: tpu_custom_call.1
$region0: #{tpu_custom_call.1}
  #allocation0 [shape = 'u32[]', space=smem, size = 0x4, offset = 0x4, fixed_abs, tag = 'smem constant byte address 0x4 - core index']
  #allocation1 [shape = 'u32[72,128]{1,0:T(1,128)}', space=vmem, size = 0x9000, scoped, tag = 'internal scratch']
  #allocation2 [shape = 'f32[1,1]{1,0:T(1,128)S(1)}', space=vmem, size = 0x200, scoped, tag = 'scoped memory for tpu_custom_call.1']
  %s0 = inlined_call_operand.vmem [shape: f32[2,128], index: 0, kind: input, shape index: {}]
  %s1 = inlined_call_operand.hbm [shape: f32[4,128], index: 1, kind: input, shape index: {}]
  %s2 = inlined_call_operand.<no memory space> [shape: f32[1,1], index: 2, kind: input, shape index: {}]
  %s3 = inlined_call_operand.vmem [shape: f32[4,2], index: 3, kind: output, shape index: {}]
  %s4 = sld [smem:[#allocation0]]
  $region26: #{tpu_custom_call.1} parent=0
    _
  %s6 = ssub.s32 1, %s4
  %s7 = scalar_select 0, %s6, %s4
  %v8 = vstv %s2
  %9 = vst [vmem:[#allocation2] sm:$0x1] %v8
  $region1: #{tpu_custom_call.1} parent=0
    #allocation3 [shape = 'u8[2048]{0}', space=vmem, size = 0x800, scoped, tag = 'input window, operand 1, single buffered']
    #allocation4 [shape = 's32[1]{0}', space=sflag, size = 0x4, scoped, tag = 'scoped memory for tpu_custom_call.1']
    %10 = vsyncpa [#allocation4], 0
    // Predicated region
    $region2: #{tpu_custom_call.1} parent=1 // pred_check
      _
    $region3: #{tpu_custom_call.1} parent=1 // pred_check_branch
      %12 = sbr.rel (0) target = $region5
    $region4: #{tpu_custom_call.1} parent=1 // pred_region
      _
    $region5: #{tpu_custom_call.1} parent=1 // pred_fallthru
      _
    // Predicated region
    $region6: #{tpu_custom_call.1} parent=1 // pred_check
      _
    $region7: #{tpu_custom_call.1} parent=1 // pred_check_branch
      %14 = sbr.rel (0) target = $region9
    $region8: #{tpu_custom_call.1} parent=1 // pred_region
      %16 = vsyncadd [#allocation4], 0
      %s18 = sshll.u32 %s1, 4
      %s19 = int_to_ptr.hbm [resolvable:$true] %s18
      %s20 = sshll.u32 [#allocation3], 4
      %s21 = int_to_ptr.vmem [resolvable:$true] %s20
      %23 = dma.hbm_to_vmem [thread:$0]  %s19, 64, %s21, [#allocation4]
    $region9: #{tpu_custom_call.1} parent=1 // pred_fallthru
      _
    // Predicated region
    $region10: #{tpu_custom_call.1} parent=1 // pred_check
      _
    $region11: #{tpu_custom_call.1} parent=1 // pred_check_branch
      %25 = sbr.rel (0) target = $region13
    $region12: #{tpu_custom_call.1} parent=1 // pred_region
      _
    $region13: #{tpu_custom_call.1} parent=1 // pred_fallthru
      _
    // Predicated region
    $region14: #{tpu_custom_call.1} parent=1 // pred_check
      _
    $region15: #{tpu_custom_call.1} parent=1 // pred_check_branch
      %27 = sbr.rel (0) target = $region17
    $region16: #{tpu_custom_call.1} parent=1 // pred_region
      %29 = dma.done [#allocation4], 64
    $region17: #{tpu_custom_call.1} parent=1 // pred_fallthru
      _
    %v30 = vld [vmem:[#allocation3] sm:$0xf]
    %v31 = vld [vmem:[%s0] sm:$0x3]
    %v32 = vld [vmem:[#allocation2] sm:$0x1]
    %v34 = vperm.slane %v32, 0
    %35 = vset.pattern.permute.xlu0 0
    %36 = vperm.xlu0 %35, %v34
    %v37 = vpop.permute.xlu0 %36
    %39 = vmatpush.xpose.msra.mxu0 0.0
    %40 = vmatpush.xpose.msra.mxu0 0.0
    %41 = vmatpush.xpose.msra.mxu0 0.0
    %42 = vmatpush.xpose.msra.mxu0 0.0
    %43 = vmatpush.xpose.msra.mxu0 0.0
    %44 = vmatpush.xpose.msra.mxu0 0.0
    %45 = vmatpush.xpose.msra.mxu0 0.0
    %46 = vmatpush.xpose.msra.mxu0 0.0
    %47 = vmatpush.xpose.msra.mxu0 0.0
    %48 = vmatpush.xpose.msra.mxu0 0.0
    %49 = vmatpush.xpose.msra.mxu0 0.0
    %50 = vmatpush.xpose.msra.mxu0 0.0
    %51 = vmatpush.xpose.msra.mxu0 0.0
    %52 = vmatpush.xpose.msra.mxu0 0.0
    %53 = vmatpush.xpose.msra.mxu0 0.0
    %54 = vmatpush.xpose.msra.mxu0 %v31
    %55 = vmatmul.f32.gmra.mxu0 %v30
    %v56 = vpop.f32.mrf.mxu0
    %v57 = vadd.f32 %v37, %v56
    %58 = vdwg.mxu0
    %v59 = vmul.f32 %v57, 0.5
    %v60 = vtanh.pop %v59
    %v61 = vadd.f32 %v60, 1.0
    %v62 = vmul.f32 %v61, 0.5
    %vm63 = vcmask 11264
    %64 = vst.msk [vmem:[%s3] sm:$0xf] %vm63, %v62
    // Predicated region
    $region18: #{tpu_custom_call.1} parent=1 // pred_check
      _
    $region19: #{tpu_custom_call.1} parent=1 // pred_check_branch
      %66 = sbr.rel (0) target = $region21
    $region20: #{tpu_custom_call.1} parent=1 // pred_region
      _
    $region21: #{tpu_custom_call.1} parent=1 // pred_fallthru
      _
    // Predicated region
    $region22: #{tpu_custom_call.1} parent=1 // pred_check
      _
    $region23: #{tpu_custom_call.1} parent=1 // pred_check_branch
      %68 = sbr.rel (0) target = $region25
    $region24: #{tpu_custom_call.1} parent=1 // pred_region
      _
    $region25: #{tpu_custom_call.1} parent=1 // pred_fallthru
      _
    %69 = vsyncpa [#allocation4], 1

</llo_original>
